<compile_context>
chip_gen: v5e
topology: v5e:2x2
jax: 0.10.0
libtpu: 0.0.40
codegen_flags: <defaults>
</compile_context>

<pallas_src>
import functools

import jax
import jax.numpy as jnp
from jax import lax
from jax.experimental import pallas as pl
from jax.experimental.pallas import tpu as pltpu


def _lstm_kernel(x_ref, wih_ref, whh_ref, bih_ref, bhh_ref, h_out_ref,
                 *, seq_len, batch, hidden):
    """Single-invocation LSTM over the whole sequence.

    x_ref   : (B*S, F)  batch-major flattened inputs (row = b*S + t)
    wih_ref : (4H, F)   PyTorch weight_ih_l0 (raw shape)
    whh_ref : (4H, H)   PyTorch weight_hh_l0 (raw shape)
    bih_ref : (1, 4H)   PyTorch bias_ih_l0
    bhh_ref : (1, 4H)   PyTorch bias_hh_l0
    h_out_ref : (B, H)  final hidden state h_T
    """
    H = hidden
    S = seq_len

    # --- One-time in-kernel layout / parameter prep (off the serial chain) ---
    bias = bih_ref[...] + bhh_ref[...]                       # (1, 4H)
    # Recurrent weight transposed ONCE (single small XLU transpose), so the
    # unrolled recurrence reuses the same (H, 4H) RHS every step.
    # (Relying on Mosaic to keep it MXU-resident; explicit matmul_push_rhs not used.)
    wh_t = jnp.transpose(whh_ref[...])                       # (H, 4H)

    # Hoisted input projection: one MXU call for every timestep.
    # dot_general contracts on W_ih's last axis -> Mosaic handles lhs . rhs^T.
    xw = lax.dot_general(
        x_ref[...], wih_ref[...],
        dimension_numbers=(((1,), (1,)), ((), ())),
        preferred_element_type=jnp.float32,
    ) + bias                                                 # (B*S, 4H), row = b*S + t

    # Single-tanh gate trick: sigmoid(z) = 0.5*tanh(0.5*z) + 0.5 (exact).
    # Column scale: 0.5 for i/f/o gate columns, 1.0 for the g (cell) column.
    # Built once at full (B, 4H) shape so no per-iteration broadcast is emitted.
    col = lax.broadcasted_iota(jnp.int32, (batch, 4 * H), 1)
    gate_scale = jnp.where((col >= 2 * H) & (col < 3 * H),
                           jnp.float32(1.0), jnp.float32(0.5))   # (B, 4H)

    h = jnp.zeros((batch, H), jnp.float32)
    c = jnp.zeros((batch, H), jnp.float32)

    # Statically unrolled time recurrence (S is small and known at trace time).
    for t in range(S):
        # Gather this timestep's projected rows (batch-major flat rows b*S+t).
        # Static slices + tiny concat; independent of h -> off the serial chain.
        g_x = jnp.concatenate(
            [xw[b * S + t: b * S + t + 1, :] for b in range(batch)], axis=0
        )                                                     # (B, 4H)

        pre = g_x + jnp.dot(h, wh_t, preferred_element_type=jnp.float32)  # (B, 4H)

        # ONE full-width EUP transcendental per step (plus the unavoidable tanh(c)).
        y = jnp.tanh(pre * gate_scale)                        # (B, 4H)
        sg = 0.5 * y + 0.5                                    # sigmoid for i/f/o cols

        # PyTorch gate order: input, forget, cell(g), output.
        i_g = sg[:, 0 * H:1 * H]
        f_g = sg[:, 1 * H:2 * H]
        g_g = y[:, 2 * H:3 * H]                               # tanh column (scale 1.0)
        o_g = sg[:, 3 * H:4 * H]

        c = f_g * c + i_g * g_g
        h = o_g * jnp.tanh(c)

    h_out_ref[...] = h.astype(h_out_ref.dtype)


@jax.jit
def encoder_forward(x_bsf, w_ih, w_hh, b_ih, b_hh):
    """Equivalent of Encoder.forward.

    x_bsf : (B, S, F) float32  (batch_first, like the PyTorch module)
    w_ih  : (4H, F), w_hh : (4H, H), b_ih/b_hh : (4H,)  -- raw PyTorch LSTM param shapes
    returns (B, H)  == hidden_state[-1, :, :]
    """
    B, S, F = x_bsf.shape
    H = w_hh.shape[1]

    # Only zero-cost row-major reshapes (bitcasts) outside the kernel:
    # no transposes, no adds, no copies are dispatched in the wrapper.
    x_flat = x_bsf.reshape(B * S, F)          # (B*S, F), row = b*S + t  (bitcast)
    b_ih2 = b_ih.reshape(1, 4 * H)            # (1, 4H)                  (bitcast)
    b_hh2 = b_hh.reshape(1, 4 * H)            # (1, 4H)                  (bitcast)

    kernel = functools.partial(_lstm_kernel, seq_len=S, batch=B, hidden=H)

    h_last = pl.pallas_call(
        kernel,
        out_shape=jax.ShapeDtypeStruct((B, H), jnp.float32),
        # Single invocation (no grid); every operand is a full, VMEM-resident block.
        in_specs=[
            pl.BlockSpec(memory_space=pltpu.MemorySpace.VMEM),  # x      (B*S, F)
            pl.BlockSpec(memory_space=pltpu.MemorySpace.VMEM),  # w_ih   (4H, F)
            pl.BlockSpec(memory_space=pltpu.MemorySpace.VMEM),  # w_hh   (4H, H)
            pl.BlockSpec(memory_space=pltpu.MemorySpace.VMEM),  # b_ih   (1, 4H)
            pl.BlockSpec(memory_space=pltpu.MemorySpace.VMEM),  # b_hh   (1, 4H)
        ],
        out_specs=pl.BlockSpec(memory_space=pltpu.MemorySpace.VMEM),  # h_T (B, H)
    )(x_flat, w_ih, w_hh, b_ih2, b_hh2)
    return h_last


def _lstm_reference(x_bsf, w_ih, w_hh, b_ih, b_hh):
    """Pure-JAX reference matching PyTorch nn.LSTM semantics (h0 = c0 = 0)."""
    B = x_bsf.shape[0]
    H = w_hh.shape[1]
    wx = w_ih.T
    wh = w_hh.T
    b = b_ih + b_hh

    def step(carry, xt):
        h, c = carry
        gates = xt @ wx + h @ wh + b
        i_g, f_g, g_g, o_g = jnp.split(gates, 4, axis=-1)
        i_g = jax.nn.sigmoid(i_g)
        f_g = jax.nn.sigmoid(f_g)
        g_g = jnp.tanh(g_g)
        o_g = jax.nn.sigmoid(o_g)
        c = f_g * c + i_g * g_g
        h = o_g * jnp.tanh(c)
        return (h, c), None

    h0 = jnp.zeros((B, H), jnp.float32)
    (h, _), _ = jax.lax.scan(step, (h0, h0), jnp.transpose(x_bsf, (1, 0, 2)))
    return h


if __name__ == "__main__":
    # Small shapes consistent with the module:
    # Encoder(seq_len=8, no_features=4, embedding_size=32)
    batch = 2
    seq_len = 8
    no_features = 4
    embedding_size = 32

    key = jax.random.PRNGKey(0)
    kx, k1, k2, k3, k4 = jax.random.split(key, 5)

    # Deterministic parameter init mimicking PyTorch LSTM's U(-1/sqrt(H), 1/sqrt(H)).
    bound = 1.0 / jnp.sqrt(jnp.float32(embedding_size))
    w_ih = jax.random.uniform(k1, (4 * embedding_size, no_features),
                              minval=-bound, maxval=bound, dtype=jnp.float32)
    w_hh = jax.random.uniform(k2, (4 * embedding_size, embedding_size),
                              minval=-bound, maxval=bound, dtype=jnp.float32)
    b_ih = jax.random.uniform(k3, (4 * embedding_size,),
                              minval=-bound, maxval=bound, dtype=jnp.float32)
    b_hh = jax.random.uniform(k4, (4 * embedding_size,),
                              minval=-bound, maxval=bound, dtype=jnp.float32)

    x = jax.random.normal(kx, (batch, seq_len, no_features), dtype=jnp.float32)

    out = encoder_forward(x, w_ih, w_hh, b_ih, b_hh)
    out = jax.block_until_ready(out)

    ref = _lstm_reference(x, w_ih, w_hh, b_ih, b_hh)
    assert out.shape == (batch, embedding_size)
    assert jnp.allclose(out, ref, atol=1e-5, rtol=1e-5), "Pallas LSTM mismatch vs reference"

    print("KERNEL_OK")
</pallas_src>

<mosaic_0001>
module attributes {stable_mosaic.version = 11 : i64} {
  func.func @_lstm_kernel(%arg0: memref<16x4xf32, #tpu.memory_space<vmem>>, %arg1: memref<128x4xf32, #tpu.memory_space<vmem>>, %arg2: memref<128x32xf32, #tpu.memory_space<vmem>>, %arg3: memref<1x128xf32, #tpu.memory_space<vmem>>, %arg4: memref<1x128xf32, #tpu.memory_space<vmem>>, %arg5: memref<2x32xf32, #tpu.memory_space<vmem>>) attributes {dimension_semantics = [], scalar_prefetch = 0 : i64, scratch_operands = 0 : i64, tpu.core_type = #tpu.core_type<tc>} {
    %c0 = arith.constant 0 : index
    %c0_0 = arith.constant 0 : index
    %0 = vector.load %arg3[%c0, %c0_0] : memref<1x128xf32, #tpu.memory_space<vmem>>, vector<1x128xf32>
    %c0_1 = arith.constant 0 : index
    %c0_2 = arith.constant 0 : index
    %1 = vector.load %arg4[%c0_1, %c0_2] : memref<1x128xf32, #tpu.memory_space<vmem>>, vector<1x128xf32>
    %2 = arith.addf %0, %1 : vector<1x128xf32>
    %c0_3 = arith.constant 0 : index
    %c0_4 = arith.constant 0 : index
    %3 = vector.load %arg2[%c0_3, %c0_4] : memref<128x32xf32, #tpu.memory_space<vmem>>, vector<128x32xf32>
    %4 = tpu.transpose %3, [1, 0] : vector<128x32xf32> -> vector<32x128xf32>
    %c0_5 = arith.constant 0 : index
    %c0_6 = arith.constant 0 : index
    %5 = vector.load %arg0[%c0_5, %c0_6] : memref<16x4xf32, #tpu.memory_space<vmem>>, vector<16x4xf32>
    %c0_7 = arith.constant 0 : index
    %c0_8 = arith.constant 0 : index
    %6 = vector.load %arg1[%c0_7, %c0_8] : memref<128x4xf32, #tpu.memory_space<vmem>>, vector<128x4xf32>
    %cst = arith.constant dense<0.000000e+00> : vector<16x128xf32>
    %7 = tpu.matmul %5, %6, %cst {dimension_numbers = #tpu.dot_dimension_numbers<[1], [1], [0], [0], [0, 0, 1, 0], [], []>} : vector<16x4xf32>, vector<128x4xf32>, vector<16x128xf32> -> vector<16x128xf32>
    %8 = vector.broadcast %2 : vector<1x128xf32> to vector<16x128xf32>
    %9 = arith.addf %7, %8 : vector<16x128xf32>
    %10 = tpu.iota {dimensions = array<i32: 1>} : vector<2x128xi32>
    %c64_i32 = arith.constant 64 : i32
    %11 = vector.broadcast %c64_i32 : i32 to vector<2x128xi32>
    %12 = arith.cmpi sge, %10, %11 : vector<2x128xi32>
    %c96_i32 = arith.constant 96 : i32
    %13 = vector.broadcast %c96_i32 : i32 to vector<2x128xi32>
    %14 = arith.cmpi slt, %10, %13 : vector<2x128xi32>
    %15 = arith.andi %12, %14 : vector<2x128xi1>
    %cst_9 = arith.constant 1.000000e+00 : f32
    %cst_10 = arith.constant 5.000000e-01 : f32
    %16 = vector.broadcast %cst_9 : f32 to vector<2x128xf32>
    %17 = vector.broadcast %cst_10 : f32 to vector<2x128xf32>
    %18 = arith.select %15, %16, %17 : vector<2x128xi1>, vector<2x128xf32>
    %cst_11 = arith.constant 0.000000e+00 : f32
    %19 = vector.broadcast %cst_11 : f32 to vector<2x32xf32>
    %cst_12 = arith.constant 0.000000e+00 : f32
    %20 = vector.broadcast %cst_12 : f32 to vector<2x32xf32>
    %21 = vector.extract_strided_slice %9 {offsets = [0, 0], sizes = [1, 128], strides = [1, 1]} : vector<16x128xf32> to vector<1x128xf32>
    %22 = vector.extract_strided_slice %9 {offsets = [8, 0], sizes = [1, 128], strides = [1, 1]} : vector<16x128xf32> to vector<1x128xf32>
    %23 = tpu.concatenate %21, %22 in 0 : vector<1x128xf32>, vector<1x128xf32> -> vector<2x128xf32>
    %cst_13 = arith.constant dense<0.000000e+00> : vector<2x128xf32>
    %24 = tpu.matmul %19, %4, %cst_13 {dimension_numbers = #tpu.dot_dimension_numbers<[1], [0], [0], [1], [0, 0, 1, 1], [], []>} : vector<2x32xf32>, vector<32x128xf32>, vector<2x128xf32> -> vector<2x128xf32>
    %25 = arith.addf %23, %24 : vector<2x128xf32>
    %26 = arith.mulf %25, %18 : vector<2x128xf32>
    %27 = math.tanh %26 : vector<2x128xf32>
    %cst_14 = arith.constant 5.000000e-01 : f32
    %28 = vector.broadcast %cst_14 : f32 to vector<2x128xf32>
    %29 = arith.mulf %28, %27 : vector<2x128xf32>
    %cst_15 = arith.constant 5.000000e-01 : f32
    %30 = vector.broadcast %cst_15 : f32 to vector<2x128xf32>
    %31 = arith.addf %29, %30 : vector<2x128xf32>
    %32 = vector.extract_strided_slice %31 {offsets = [0, 0], sizes = [2, 32], strides = [1, 1]} : vector<2x128xf32> to vector<2x32xf32>
    %33 = vector.extract_strided_slice %31 {offsets = [0, 32], sizes = [2, 32], strides = [1, 1]} : vector<2x128xf32> to vector<2x32xf32>
    %34 = vector.extract_strided_slice %27 {offsets = [0, 64], sizes = [2, 32], strides = [1, 1]} : vector<2x128xf32> to vector<2x32xf32>
    %35 = vector.extract_strided_slice %31 {offsets = [0, 96], sizes = [2, 32], strides = [1, 1]} : vector<2x128xf32> to vector<2x32xf32>
    %36 = arith.mulf %33, %20 : vector<2x32xf32>
    %37 = arith.mulf %32, %34 : vector<2x32xf32>
    %38 = arith.addf %36, %37 : vector<2x32xf32>
    %39 = math.tanh %38 : vector<2x32xf32>
    %40 = arith.mulf %35, %39 : vector<2x32xf32>
    %41 = vector.extract_strided_slice %9 {offsets = [1, 0], sizes = [1, 128], strides = [1, 1]} : vector<16x128xf32> to vector<1x128xf32>
    %42 = vector.extract_strided_slice %9 {offsets = [9, 0], sizes = [1, 128], strides = [1, 1]} : vector<16x128xf32> to vector<1x128xf32>
    %43 = tpu.concatenate %41, %42 in 0 : vector<1x128xf32>, vector<1x128xf32> -> vector<2x128xf32>
    %cst_16 = arith.constant dense<0.000000e+00> : vector<2x128xf32>
    %44 = tpu.matmul %40, %4, %cst_16 {dimension_numbers = #tpu.dot_dimension_numbers<[1], [0], [0], [1], [0, 0, 1, 1], [], []>} : vector<2x32xf32>, vector<32x128xf32>, vector<2x128xf32> -> vector<2x128xf32>
    %45 = arith.addf %43, %44 : vector<2x128xf32>
    %46 = arith.mulf %45, %18 : vector<2x128xf32>
    %47 = math.tanh %46 : vector<2x128xf32>
    %cst_17 = arith.constant 5.000000e-01 : f32
    %48 = vector.broadcast %cst_17 : f32 to vector<2x128xf32>
    %49 = arith.mulf %48, %47 : vector<2x128xf32>
    %cst_18 = arith.constant 5.000000e-01 : f32
    %50 = vector.broadcast %cst_18 : f32 to vector<2x128xf32>
    %51 = arith.addf %49, %50 : vector<2x128xf32>
    %52 = vector.extract_strided_slice %51 {offsets = [0, 0], sizes = [2, 32], strides = [1, 1]} : vector<2x128xf32> to vector<2x32xf32>
    %53 = vector.extract_strided_slice %51 {offsets = [0, 32], sizes = [2, 32], strides = [1, 1]} : vector<2x128xf32> to vector<2x32xf32>
    %54 = vector.extract_strided_slice %47 {offsets = [0, 64], sizes = [2, 32], strides = [1, 1]} : vector<2x128xf32> to vector<2x32xf32>
    %55 = vector.extract_strided_slice %51 {offsets = [0, 96], sizes = [2, 32], strides = [1, 1]} : vector<2x128xf32> to vector<2x32xf32>
    %56 = arith.mulf %53, %38 : vector<2x32xf32>
    %57 = arith.mulf %52, %54 : vector<2x32xf32>
    %58 = arith.addf %56, %57 : vector<2x32xf32>
    %59 = math.tanh %58 : vector<2x32xf32>
    %60 = arith.mulf %55, %59 : vector<2x32xf32>
    %61 = vector.extract_strided_slice %9 {offsets = [2, 0], sizes = [1, 128], strides = [1, 1]} : vector<16x128xf32> to vector<1x128xf32>
    %62 = vector.extract_strided_slice %9 {offsets = [10, 0], sizes = [1, 128], strides = [1, 1]} : vector<16x128xf32> to vector<1x128xf32>
    %63 = tpu.concatenate %61, %62 in 0 : vector<1x128xf32>, vector<1x128xf32> -> vector<2x128xf32>
    %cst_19 = arith.constant dense<0.000000e+00> : vector<2x128xf32>
    %64 = tpu.matmul %60, %4, %cst_19 {dimension_numbers = #tpu.dot_dimension_numbers<[1], [0], [0], [1], [0, 0, 1, 1], [], []>} : vector<2x32xf32>, vector<32x128xf32>, vector<2x128xf32> -> vector<2x128xf32>
    %65 = arith.addf %63, %64 : vector<2x128xf32>
    %66 = arith.mulf %65, %18 : vector<2x128xf32>
    %67 = math.tanh %66 : vector<2x128xf32>
    %cst_20 = arith.constant 5.000000e-01 : f32
    %68 = vector.broadcast %cst_20 : f32 to vector<2x128xf32>
    %69 = arith.mulf %68, %67 : vector<2x128xf32>
    %cst_21 = arith.constant 5.000000e-01 : f32
    %70 = vector.broadcast %cst_21 : f32 to vector<2x128xf32>
    %71 = arith.addf %69, %70 : vector<2x128xf32>
    %72 = vector.extract_strided_slice %71 {offsets = [0, 0], sizes = [2, 32], strides = [1, 1]} : vector<2x128xf32> to vector<2x32xf32>
    %73 = vector.extract_strided_slice %71 {offsets = [0, 32], sizes = [2, 32], strides = [1, 1]} : vector<2x128xf32> to vector<2x32xf32>
    %74 = vector.extract_strided_slice %67 {offsets = [0, 64], sizes = [2, 32], strides = [1, 1]} : vector<2x128xf32> to vector<2x32xf32>
    %75 = vector.extract_strided_slice %71 {offsets = [0, 96], sizes = [2, 32], strides = [1, 1]} : vector<2x128xf32> to vector<2x32xf32>
    %76 = arith.mulf %73, %58 : vector<2x32xf32>
    %77 = arith.mulf %72, %74 : vector<2x32xf32>
    %78 = arith.addf %76, %77 : vector<2x32xf32>
    %79 = math.tanh %78 : vector<2x32xf32>
    %80 = arith.mulf %75, %79 : vector<2x32xf32>
    %81 = vector.extract_strided_slice %9 {offsets = [3, 0], sizes = [1, 128], strides = [1, 1]} : vector<16x128xf32> to vector<1x128xf32>
    %82 = vector.extract_strided_slice %9 {offsets = [11, 0], sizes = [1, 128], strides = [1, 1]} : vector<16x128xf32> to vector<1x128xf32>
    %83 = tpu.concatenate %81, %82 in 0 : vector<1x128xf32>, vector<1x128xf32> -> vector<2x128xf32>
    %cst_22 = arith.constant dense<0.000000e+00> : vector<2x128xf32>
    %84 = tpu.matmul %80, %4, %cst_22 {dimension_numbers = #tpu.dot_dimension_numbers<[1], [0], [0], [1], [0, 0, 1, 1], [], []>} : vector<2x32xf32>, vector<32x128xf32>, vector<2x128xf32> -> vector<2x128xf32>
    %85 = arith.addf %83, %84 : vector<2x128xf32>
    %86 = arith.mulf %85, %18 : vector<2x128xf32>
    %87 = math.tanh %86 : vector<2x128xf32>
    %cst_23 = arith.constant 5.000000e-01 : f32
    %88 = vector.broadcast %cst_23 : f32 to vector<2x128xf32>
    %89 = arith.mulf %88, %87 : vector<2x128xf32>
    %cst_24 = arith.constant 5.000000e-01 : f32
    %90 = vector.broadcast %cst_24 : f32 to vector<2x128xf32>
    %91 = arith.addf %89, %90 : vector<2x128xf32>
    %92 = vector.extract_strided_slice %91 {offsets = [0, 0], sizes = [2, 32], strides = [1, 1]} : vector<2x128xf32> to vector<2x32xf32>
    %93 = vector.extract_strided_slice %91 {offsets = [0, 32], sizes = [2, 32], strides = [1, 1]} : vector<2x128xf32> to vector<2x32xf32>
    %94 = vector.extract_strided_slice %87 {offsets = [0, 64], sizes = [2, 32], strides = [1, 1]} : vector<2x128xf32> to vector<2x32xf32>
    %95 = vector.extract_strided_slice %91 {offsets = [0, 96], sizes = [2, 32], strides = [1, 1]} : vector<2x128xf32> to vector<2x32xf32>
    %96 = arith.mulf %93, %78 : vector<2x32xf32>
    %97 = arith.mulf %92, %94 : vector<2x32xf32>
    %98 = arith.addf %96, %97 : vector<2x32xf32>
    %99 = math.tanh %98 : vector<2x32xf32>
    %100 = arith.mulf %95, %99 : vector<2x32xf32>
    %101 = vector.extract_strided_slice %9 {offsets = [4, 0], sizes = [1, 128], strides = [1, 1]} : vector<16x128xf32> to vector<1x128xf32>
    %102 = vector.extract_strided_slice %9 {offsets = [12, 0], sizes = [1, 128], strides = [1, 1]} : vector<16x128xf32> to vector<1x128xf32>
    %103 = tpu.concatenate %101, %102 in 0 : vector<1x128xf32>, vector<1x128xf32> -> vector<2x128xf32>
    %cst_25 = arith.constant dense<0.000000e+00> : vector<2x128xf32>
    %104 = tpu.matmul %100, %4, %cst_25 {dimension_numbers = #tpu.dot_dimension_numbers<[1], [0], [0], [1], [0, 0, 1, 1], [], []>} : vector<2x32xf32>, vector<32x128xf32>, vector<2x128xf32> -> vector<2x128xf32>
    %105 = arith.addf %103, %104 : vector<2x128xf32>
    %106 = arith.mulf %105, %18 : vector<2x128xf32>
    %107 = math.tanh %106 : vector<2x128xf32>
    %cst_26 = arith.constant 5.000000e-01 : f32
    %108 = vector.broadcast %cst_26 : f32 to vector<2x128xf32>
    %109 = arith.mulf %108, %107 : vector<2x128xf32>
    %cst_27 = arith.constant 5.000000e-01 : f32
    %110 = vector.broadcast %cst_27 : f32 to vector<2x128xf32>
    %111 = arith.addf %109, %110 : vector<2x128xf32>
    %112 = vector.extract_strided_slice %111 {offsets = [0, 0], sizes = [2, 32], strides = [1, 1]} : vector<2x128xf32> to vector<2x32xf32>
    %113 = vector.extract_strided_slice %111 {offsets = [0, 32], sizes = [2, 32], strides = [1, 1]} : vector<2x128xf32> to vector<2x32xf32>
    %114 = vector.extract_strided_slice %107 {offsets = [0, 64], sizes = [2, 32], strides = [1, 1]} : vector<2x128xf32> to vector<2x32xf32>
    %115 = vector.extract_strided_slice %111 {offsets = [0, 96], sizes = [2, 32], strides = [1, 1]} : vector<2x128xf32> to vector<2x32xf32>
    %116 = arith.mulf %113, %98 : vector<2x32xf32>
    %117 = arith.mulf %112, %114 : vector<2x32xf32>
    %118 = arith.addf %116, %117 : vector<2x32xf32>
    %119 = math.tanh %118 : vector<2x32xf32>
    %120 = arith.mulf %115, %119 : vector<2x32xf32>
    %121 = vector.extract_strided_slice %9 {offsets = [5, 0], sizes = [1, 128], strides = [1, 1]} : vector<16x128xf32> to vector<1x128xf32>
    %122 = vector.extract_strided_slice %9 {offsets = [13, 0], sizes = [1, 128], strides = [1, 1]} : vector<16x128xf32> to vector<1x128xf32>
    %123 = tpu.concatenate %121, %122 in 0 : vector<1x128xf32>, vector<1x128xf32> -> vector<2x128xf32>
    %cst_28 = arith.constant dense<0.000000e+00> : vector<2x128xf32>
    %124 = tpu.matmul %120, %4, %cst_28 {dimension_numbers = #tpu.dot_dimension_numbers<[1], [0], [0], [1], [0, 0, 1, 1], [], []>} : vector<2x32xf32>, vector<32x128xf32>, vector<2x128xf32> -> vector<2x128xf32>
    %125 = arith.addf %123, %124 : vector<2x128xf32>
    %126 = arith.mulf %125, %18 : vector<2x128xf32>
    %127 = math.tanh %126 : vector<2x128xf32>
    %cst_29 = arith.constant 5.000000e-01 : f32
    %128 = vector.broadcast %cst_29 : f32 to vector<2x128xf32>
    %129 = arith.mulf %128, %127 : vector<2x128xf32>
    %cst_30 = arith.constant 5.000000e-01 : f32
    %130 = vector.broadcast %cst_30 : f32 to vector<2x128xf32>
    %131 = arith.addf %129, %130 : vector<2x128xf32>
    %132 = vector.extract_strided_slice %131 {offsets = [0, 0], sizes = [2, 32], strides = [1, 1]} : vector<2x128xf32> to vector<2x32xf32>
    %133 = vector.extract_strided_slice %131 {offsets = [0, 32], sizes = [2, 32], strides = [1, 1]} : vector<2x128xf32> to vector<2x32xf32>
    %134 = vector.extract_strided_slice %127 {offsets = [0, 64], sizes = [2, 32], strides = [1, 1]} : vector<2x128xf32> to vector<2x32xf32>
    %135 = vector.extract_strided_slice %131 {offsets = [0, 96], sizes = [2, 32], strides = [1, 1]} : vector<2x128xf32> to vector<2x32xf32>
    %136 = arith.mulf %133, %118 : vector<2x32xf32>
    %137 = arith.mulf %132, %134 : vector<2x32xf32>
    %138 = arith.addf %136, %137 : vector<2x32xf32>
    %139 = math.tanh %138 : vector<2x32xf32>
    %140 = arith.mulf %135, %139 : vector<2x32xf32>
    %141 = vector.extract_strided_slice %9 {offsets = [6, 0], sizes = [1, 128], strides = [1, 1]} : vector<16x128xf32> to vector<1x128xf32>
    %142 = vector.extract_strided_slice %9 {offsets = [14, 0], sizes = [1, 128], strides = [1, 1]} : vector<16x128xf32> to vector<1x128xf32>
    %143 = tpu.concatenate %141, %142 in 0 : vector<1x128xf32>, vector<1x128xf32> -> vector<2x128xf32>
    %cst_31 = arith.constant dense<0.000000e+00> : vector<2x128xf32>
    %144 = tpu.matmul %140, %4, %cst_31 {dimension_numbers = #tpu.dot_dimension_numbers<[1], [0], [0], [1], [0, 0, 1, 1], [], []>} : vector<2x32xf32>, vector<32x128xf32>, vector<2x128xf32> -> vector<2x128xf32>
    %145 = arith.addf %143, %144 : vector<2x128xf32>
    %146 = arith.mulf %145, %18 : vector<2x128xf32>
    %147 = math.tanh %146 : vector<2x128xf32>
    %cst_32 = arith.constant 5.000000e-01 : f32
    %148 = vector.broadcast %cst_32 : f32 to vector<2x128xf32>
    %149 = arith.mulf %148, %147 : vector<2x128xf32>
    %cst_33 = arith.constant 5.000000e-01 : f32
    %150 = vector.broadcast %cst_33 : f32 to vector<2x128xf32>
    %151 = arith.addf %149, %150 : vector<2x128xf32>
    %152 = vector.extract_strided_slice %151 {offsets = [0, 0], sizes = [2, 32], strides = [1, 1]} : vector<2x128xf32> to vector<2x32xf32>
    %153 = vector.extract_strided_slice %151 {offsets = [0, 32], sizes = [2, 32], strides = [1, 1]} : vector<2x128xf32> to vector<2x32xf32>
    %154 = vector.extract_strided_slice %147 {offsets = [0, 64], sizes = [2, 32], strides = [1, 1]} : vector<2x128xf32> to vector<2x32xf32>
    %155 = vector.extract_strided_slice %151 {offsets = [0, 96], sizes = [2, 32], strides = [1, 1]} : vector<2x128xf32> to vector<2x32xf32>
    %156 = arith.mulf %153, %138 : vector<2x32xf32>
    %157 = arith.mulf %152, %154 : vector<2x32xf32>
    %158 = arith.addf %156, %157 : vector<2x32xf32>
    %159 = math.tanh %158 : vector<2x32xf32>
    %160 = arith.mulf %155, %159 : vector<2x32xf32>
    %161 = vector.extract_strided_slice %9 {offsets = [7, 0], sizes = [1, 128], strides = [1, 1]} : vector<16x128xf32> to vector<1x128xf32>
    %162 = vector.extract_strided_slice %9 {offsets = [15, 0], sizes = [1, 128], strides = [1, 1]} : vector<16x128xf32> to vector<1x128xf32>
    %163 = tpu.concatenate %161, %162 in 0 : vector<1x128xf32>, vector<1x128xf32> -> vector<2x128xf32>
    %cst_34 = arith.constant dense<0.000000e+00> : vector<2x128xf32>
    %164 = tpu.matmul %160, %4, %cst_34 {dimension_numbers = #tpu.dot_dimension_numbers<[1], [0], [0], [1], [0, 0, 1, 1], [], []>} : vector<2x32xf32>, vector<32x128xf32>, vector<2x128xf32> -> vector<2x128xf32>
    %165 = arith.addf %163, %164 : vector<2x128xf32>
    %166 = arith.mulf %165, %18 : vector<2x128xf32>
    %167 = math.tanh %166 : vector<2x128xf32>
    %cst_35 = arith.constant 5.000000e-01 : f32
    %168 = vector.broadcast %cst_35 : f32 to vector<2x128xf32>
    %169 = arith.mulf %168, %167 : vector<2x128xf32>
    %cst_36 = arith.constant 5.000000e-01 : f32
    %170 = vector.broadcast %cst_36 : f32 to vector<2x128xf32>
    %171 = arith.addf %169, %170 : vector<2x128xf32>
    %172 = vector.extract_strided_slice %171 {offsets = [0, 0], sizes = [2, 32], strides = [1, 1]} : vector<2x128xf32> to vector<2x32xf32>
    %173 = vector.extract_strided_slice %171 {offsets = [0, 32], sizes = [2, 32], strides = [1, 1]} : vector<2x128xf32> to vector<2x32xf32>
    %174 = vector.extract_strided_slice %167 {offsets = [0, 64], sizes = [2, 32], strides = [1, 1]} : vector<2x128xf32> to vector<2x32xf32>
    %175 = vector.extract_strided_slice %171 {offsets = [0, 96], sizes = [2, 32], strides = [1, 1]} : vector<2x128xf32> to vector<2x32xf32>
    %176 = arith.mulf %173, %158 : vector<2x32xf32>
    %177 = arith.mulf %172, %174 : vector<2x32xf32>
    %178 = arith.addf %176, %177 : vector<2x32xf32>
    %179 = math.tanh %178 : vector<2x32xf32>
    %180 = arith.mulf %175, %179 : vector<2x32xf32>
    %c0_37 = arith.constant 0 : index
    %c0_38 = arith.constant 0 : index
    %181 = vector.load %arg5[%c0_37, %c0_38] : memref<2x32xf32, #tpu.memory_space<vmem>>, vector<2x32xf32>
    tpu.vector_store %arg5[%c0_37, %c0_38], %180 {strides = array<i32>} : memref<2x32xf32, #tpu.memory_space<vmem>>, vector<2x32xf32>,
    return
  }
}

</mosaic_0001>

<llo_original>
// kernel: encoder_forward.1
$region0: #{encoder_forward.1}
  #allocation0 [shape = 'u32[]', space=smem, size = 0x4, offset = 0x4, fixed_abs, tag = 'smem constant byte address 0x4 - core index']
  #allocation1 [shape = 'u32[72,128]{1,0:T(1,128)}', space=vmem, size = 0x9000, scoped, tag = 'internal scratch']
  %s0 = inlined_call_operand.vmem [shape: f32[16,4], index: 0, kind: input, shape index: {}]
  %s1 = inlined_call_operand.vmem [shape: f32[128,4], index: 1, kind: input, shape index: {}]
  %s2 = inlined_call_operand.vmem [shape: f32[128,32], index: 2, kind: input, shape index: {}]
  %s3 = inlined_call_operand.vmem [shape: f32[1,128], index: 3, kind: input, shape index: {}]
  %s4 = inlined_call_operand.vmem [shape: f32[1,128], index: 4, kind: input, shape index: {}]
  %s5 = inlined_call_operand.hbm [shape: f32[2,32], index: 5, kind: output, shape index: {}]
  %s6 = sld [smem:[#allocation0]]
  $region30: #{encoder_forward.1} parent=0
    _
  %s8 = ssub.s32 1, %s6
  %s9 = scalar_select 0, %s8, %s6
  $region1: #{encoder_forward.1} parent=0
    #allocation2 [shape = 'u8[1024]{0}', space=vmem, size = 0x400, scoped, tag = 'output window, operand 0, single buffered']
    #allocation3 [shape = 's32[1]{0}', space=sflag, size = 0x4, scoped, tag = 'scoped memory for encoder_forward.1']
    %10 = vsyncpa [#allocation3], 0
    // Predicated region
    $region2: #{encoder_forward.1} parent=1 // pred_check
      _
    $region3: #{encoder_forward.1} parent=1 // pred_check_branch
      %12 = sbr.rel (0) target = $region5
    $region4: #{encoder_forward.1} parent=1 // pred_region
      _
    $region5: #{encoder_forward.1} parent=1 // pred_fallthru
      _
    // Predicated region
    $region6: #{encoder_forward.1} parent=1 // pred_check
      _
    $region7: #{encoder_forward.1} parent=1 // pred_check_branch
      %14 = sbr.rel (0) target = $region9
    $region8: #{encoder_forward.1} parent=1 // pred_region
      _
    $region9: #{encoder_forward.1} parent=1 // pred_fallthru
      _
    // Predicated region
    $region10: #{encoder_forward.1} parent=1 // pred_check
      _
    $region11: #{encoder_forward.1} parent=1 // pred_check_branch
      %16 = sbr.rel (0) target = $region13
    $region12: #{encoder_forward.1} parent=1 // pred_region
      _
    $region13: #{encoder_forward.1} parent=1 // pred_fallthru
      _
    // Predicated region
    $region14: #{encoder_forward.1} parent=1 // pred_check
      _
    $region15: #{encoder_forward.1} parent=1 // pred_check_branch
      %18 = sbr.rel (0) target = $region17
    $region16: #{encoder_forward.1} parent=1 // pred_region
      _
    $region17: #{encoder_forward.1} parent=1 // pred_fallthru
      _
    // Predicated region
    $region18: #{encoder_forward.1} parent=1 // pred_check
      _
    $region19: #{encoder_forward.1} parent=1 // pred_check_branch
      %20 = sbr.rel (0) target = $region21
    $region20: #{encoder_forward.1} parent=1 // pred_region
      _
    $region21: #{encoder_forward.1} parent=1 // pred_fallthru
      _
    %v21 = vld [vmem:[%s3] sm:$0x1]
    %v22 = vld [vmem:[%s4] sm:$0x1]
    %v23 = vadd.f32 %v21, %v22
    %v24 = vld [vmem:[%s2] sm:$0xff]
    %v25 = vld [vmem:[%s2 + $0x8] sm:$0xff]
    %v26 = vld [vmem:[%s2 + $0x10] sm:$0xff]
    %v27 = vld [vmem:[%s2 + $0x18] sm:$0xff]
    %v28 = vld [vmem:[%s2 + $0x20] sm:$0xff]
    %v29 = vld [vmem:[%s2 + $0x28] sm:$0xff]
    %v30 = vld [vmem:[%s2 + $0x30] sm:$0xff]
    %v31 = vld [vmem:[%s2 + $0x38] sm:$0xff]
    %v32 = vld [vmem:[%s2 + $0x40] sm:$0xff]
    %v33 = vld [vmem:[%s2 + $0x48] sm:$0xff]
    %v34 = vld [vmem:[%s2 + $0x50] sm:$0xff]
    %v35 = vld [vmem:[%s2 + $0x58] sm:$0xff]
    %v36 = vld [vmem:[%s2 + $0x60] sm:$0xff]
    %v37 = vld [vmem:[%s2 + $0x68] sm:$0xff]
    %v38 = vld [vmem:[%s2 + $0x70] sm:$0xff]
    %v39 = vld [vmem:[%s2 + $0x78] sm:$0xff]
    %v40 = vld [vmem:[%s0] sm:$0xff]
    %v41 = vld [vmem:[%s0 + $0x8] sm:$0xff]
    %v42 = vld [vmem:[%s1] sm:$0xff]
    %v43 = vld [vmem:[%s1 + $0x8] sm:$0xff]
    %v44 = vld [vmem:[%s1 + $0x10] sm:$0xff]
    %v45 = vld [vmem:[%s1 + $0x18] sm:$0xff]
    %v46 = vld [vmem:[%s1 + $0x20] sm:$0xff]
    %v47 = vld [vmem:[%s1 + $0x28] sm:$0xff]
    %v48 = vld [vmem:[%s1 + $0x30] sm:$0xff]
    %v49 = vld [vmem:[%s1 + $0x38] sm:$0xff]
    %v50 = vld [vmem:[%s1 + $0x40] sm:$0xff]
    %v51 = vld [vmem:[%s1 + $0x48] sm:$0xff]
    %v52 = vld [vmem:[%s1 + $0x50] sm:$0xff]
    %v53 = vld [vmem:[%s1 + $0x58] sm:$0xff]
    %v54 = vld [vmem:[%s1 + $0x60] sm:$0xff]
    %v55 = vld [vmem:[%s1 + $0x68] sm:$0xff]
    %v56 = vld [vmem:[%s1 + $0x70] sm:$0xff]
    %v57 = vld [vmem:[%s1 + $0x78] sm:$0xff]
    %v59 = vperm.slane %v23, 0
    %vm61 = vcmask 31744
    %v63 = vsel %vm61, %v40, 0
    %v66 = vsel %vm61, %v41, 0
    %v69 = vsel %vm61, %v42, 0
    %v72 = vsel %vm61, %v43, 0
    %v75 = vsel %vm61, %v44, 0
    %v78 = vsel %vm61, %v45, 0
    %v81 = vsel %vm61, %v46, 0
    %v84 = vsel %vm61, %v47, 0
    %v87 = vsel %vm61, %v48, 0
    %v90 = vsel %vm61, %v49, 0
    %v93 = vsel %vm61, %v50, 0
    %v96 = vsel %vm61, %v51, 0
    %v99 = vsel %vm61, %v52, 0
    %v102 = vsel %vm61, %v53, 0
    %v105 = vsel %vm61, %v54, 0
    %v108 = vsel %vm61, %v55, 0
    %v111 = vsel %vm61, %v56, 0
    %v114 = vsel %vm61, %v57, 0
    %116 = vmatpush.xpose.msra.mxu0 %v114
    %117 = vmatpush.xpose.msra.mxu0 %v111
    %118 = vmatpush.xpose.msra.mxu0 %v108
    %119 = vmatpush.xpose.msra.mxu0 %v105
    %120 = vmatpush.xpose.msra.mxu0 %v102
    %121 = vmatpush.xpose.msra.mxu0 %v99
    %122 = vmatpush.xpose.msra.mxu0 %v96
    %123 = vmatpush.xpose.msra.mxu0 %v93
    %124 = vmatpush.xpose.msra.mxu0 %v90
    %125 = vmatpush.xpose.msra.mxu0 %v87
    %126 = vmatpush.xpose.msra.mxu0 %v84
    %127 = vmatpush.xpose.msra.mxu0 %v81
    %128 = vmatpush.xpose.msra.mxu0 %v78
    %129 = vmatpush.xpose.msra.mxu0 %v75
    %130 = vmatpush.xpose.msra.mxu0 %v72
    %131 = vmatpush.xpose.msra.mxu0 %v69
    %132 = vmatmul.f32.gmra.mxu0 %v63
    %v133 = vpop.f32.mrf.mxu0
    %v134 = vadd.f32 %v59, %v133
    %135 = vmatmul.f32.gmra.mxu0 %v66
    %v136 = vpop.f32.mrf.mxu0
    %v137 = vadd.f32 %v59, %v136
    %138 = vdwg.mxu0
    %v139 = vlaneseq
    %v140 = vand.u32 %v139, 127
    %vm141 = vcmp.ge.s32.totalorder %v140, 64
    %vm142 = vcmp.lt.s32.totalorder %v140, 96
    %vm143 = vmand %vm141, %vm142
    %v144 = vsel %vm143, 1.0, 0.5
    %v146 = vrot.slane %v137, 7
    %vm148 = vcmask 1040384
    %v149 = vsel %vm148, %v134, %v146
    %vm150 = vcmask 261120
    %v152 = vsel %vm150, 0.0, 0
    %v155 = vsel %vm150, %v24, 0
    %v158 = vsel %vm150, %v25, 0
    %v161 = vsel %vm150, %v26, 0
    %v164 = vsel %vm150, %v27, 0
    %v167 = vsel %vm150, %v28, 0
    %v170 = vsel %vm150, %v29, 0
    %v173 = vsel %vm150, %v30, 0
    %v176 = vsel %vm150, %v31, 0
    %v179 = vsel %vm150, %v32, 0
    %v182 = vsel %vm150, %v33, 0
    %v185 = vsel %vm150, %v34, 0
    %v188 = vsel %vm150, %v35, 0
    %v191 = vsel %vm150, %v36, 0
    %v194 = vsel %vm150, %v37, 0
    %v197 = vsel %vm150, %v38, 0
    %v200 = vsel %vm150, %v39, 0
    %202 = vmatpush.xpose.msra.mxu0 %v200
    %203 = vmatpush.xpose.msra.mxu0 %v197
    %204 = vmatpush.xpose.msra.mxu0 %v194
    %205 = vmatpush.xpose.msra.mxu0 %v191
    %206 = vmatpush.xpose.msra.mxu0 %v188
    %207 = vmatpush.xpose.msra.mxu0 %v185
    %208 = vmatpush.xpose.msra.mxu0 %v182
    %209 = vmatpush.xpose.msra.mxu0 %v179
    %210 = vmatpush.xpose.msra.mxu0 %v176
    %211 = vmatpush.xpose.msra.mxu0 %v173
    %212 = vmatpush.xpose.msra.mxu0 %v170
    %213 = vmatpush.xpose.msra.mxu0 %v167
    %214 = vmatpush.xpose.msra.mxu0 %v164
    %215 = vmatpush.xpose.msra.mxu0 %v161
    %216 = vmatpush.xpose.msra.mxu0 %v158
    %217 = vmatpush.xpose.msra.mxu0 %v155
    %218 = vmatmul.f32.gmra.mxu0 %v152
    %v219 = vpop.f32.mrf.mxu0
    %v220 = vadd.f32 0.0, %v219
    %221 = vdwg.mxu0
    %v222 = vadd.f32 %v149, %v220
    %v223 = vmul.f32 %v222, %v144
    %v224 = vtanh.pop %v223
    %v225 = vmul.f32 %v224, 0.5
    %v226 = vadd.f32 %v225, 0.5
    %v227 = vmul.f32 %v226, 0.0
    %229 = vrot.lane.b32.xlu0 %v224, 64
    %v230 = vpop.permute.xlu0 %229
    %v232 = vmul.f32 %v226, %v230
    %234 = vrot.lane.b32.xlu0 %v232, 32
    %v235 = vpop.permute.xlu0 %234
    %v237 = vadd.f32 %v227, %v235
    %v238 = vtanh.pop %v237
    %240 = vrot.lane.b32.xlu0 %v238, 64
    %v241 = vpop.permute.xlu0 %240
    %v243 = vmul.f32 %v226, %v241
    %v245 = vrot.slane %v134, 1
    %v247 = vsel %vm148, %v245, %v137
    %249 = vrot.lane.b32.xlu0 %v243, 32
    %v250 = vpop.permute.xlu0 %249
    %v251 = vsel %vm150, %v250, 0
    %253 = vmatpush.xpose.msra.mxu0 %v200
    %254 = vmatpush.xpose.msra.mxu0 %v197
    %255 = vmatpush.xpose.msra.mxu0 %v194
    %256 = vmatpush.xpose.msra.mxu0 %v191
    %257 = vmatpush.xpose.msra.mxu0 %v188
    %258 = vmatpush.xpose.msra.mxu0 %v185
    %259 = vmatpush.xpose.msra.mxu0 %v182
    %260 = vmatpush.xpose.msra.mxu0 %v179
    %261 = vmatpush.xpose.msra.mxu0 %v176
    %262 = vmatpush.xpose.msra.mxu0 %v173
    %263 = vmatpush.xpose.msra.mxu0 %v170
    %264 = vmatpush.xpose.msra.mxu0 %v167
    %265 = vmatpush.xpose.msra.mxu0 %v164
    %266 = vmatpush.xpose.msra.mxu0 %v161
    %267 = vmatpush.xpose.msra.mxu0 %v158
    %268 = vmatpush.xpose.msra.mxu0 %v155
    %269 = vmatmul.f32.gmra.mxu0 %v251
    %v270 = vpop.f32.mrf.mxu0
    %v271 = vadd.f32 0.0, %v270
    %272 = vdwg.mxu0
    %v273 = vadd.f32 %v247, %v271
    %v274 = vmul.f32 %v273, %v144
    %v275 = vtanh.pop %v274
    %v276 = vmul.f32 %v275, 0.5
    %v277 = vadd.f32 %v276, 0.5
    %v278 = vmul.f32 %v277, %v237
    %280 = vrot.lane.b32.xlu0 %v275, 64
    %v281 = vpop.permute.xlu0 %280
    %v283 = vmul.f32 %v277, %v281
    %285 = vrot.lane.b32.xlu0 %v283, 32
    %v286 = vpop.permute.xlu0 %285
    %v288 = vadd.f32 %v278, %v286
    %v289 = vtanh.pop %v288
    %291 = vrot.lane.b32.xlu0 %v289, 64
    %v292 = vpop.permute.xlu0 %291
    %v294 = vmul.f32 %v277, %v292
    %v295 = vrot.slane %v134, 2
    %v297 = vrot.slane %v137, 1
    %v299 = vsel %vm148, %v295, %v297
    %301 = vrot.lane.b32.xlu0 %v294, 32
    %v302 = vpop.permute.xlu0 %301
    %v303 = vsel %vm150, %v302, 0
    %305 = vmatpush.xpose.msra.mxu0 %v200
    %306 = vmatpush.xpose.msra.mxu0 %v197
    %307 = vmatpush.xpose.msra.mxu0 %v194
    %308 = vmatpush.xpose.msra.mxu0 %v191
    %309 = vmatpush.xpose.msra.mxu0 %v188
    %310 = vmatpush.xpose.msra.mxu0 %v185
    %311 = vmatpush.xpose.msra.mxu0 %v182
    %312 = vmatpush.xpose.msra.mxu0 %v179
    %313 = vmatpush.xpose.msra.mxu0 %v176
    %314 = vmatpush.xpose.msra.mxu0 %v173
    %315 = vmatpush.xpose.msra.mxu0 %v170
    %316 = vmatpush.xpose.msra.mxu0 %v167
    %317 = vmatpush.xpose.msra.mxu0 %v164
    %318 = vmatpush.xpose.msra.mxu0 %v161
    %319 = vmatpush.xpose.msra.mxu0 %v158
    %320 = vmatpush.xpose.msra.mxu0 %v155
    %321 = vmatmul.f32.gmra.mxu0 %v303
    %v322 = vpop.f32.mrf.mxu0
    %v323 = vadd.f32 0.0, %v322
    %324 = vdwg.mxu0
    %v325 = vadd.f32 %v299, %v323
    %v326 = vmul.f32 %v325, %v144
    %v327 = vtanh.pop %v326
    %v328 = vmul.f32 %v327, 0.5
    %v329 = vadd.f32 %v328, 0.5
    %v330 = vmul.f32 %v329, %v288
    %332 = vrot.lane.b32.xlu0 %v327, 64
    %v333 = vpop.permute.xlu0 %332
    %v335 = vmul.f32 %v329, %v333
    %337 = vrot.lane.b32.xlu0 %v335, 32
    %v338 = vpop.permute.xlu0 %337
    %v340 = vadd.f32 %v330, %v338
    %v341 = vtanh.pop %v340
    %343 = vrot.lane.b32.xlu0 %v341, 64
    %v344 = vpop.permute.xlu0 %343
    %v346 = vmul.f32 %v329, %v344
    %v347 = vrot.slane %v134, 3
    %v349 = vrot.slane %v137, 2
    %v351 = vsel %vm148, %v347, %v349
    %353 = vrot.lane.b32.xlu0 %v346, 32
    %v354 = vpop.permute.xlu0 %353
    %v355 = vsel %vm150, %v354, 0
    %357 = vmatpush.xpose.msra.mxu0 %v200
    %358 = vmatpush.xpose.msra.mxu0 %v197
    %359 = vmatpush.xpose.msra.mxu0 %v194
    %360 = vmatpush.xpose.msra.mxu0 %v191
    %361 = vmatpush.xpose.msra.mxu0 %v188
    %362 = vmatpush.xpose.msra.mxu0 %v185
    %363 = vmatpush.xpose.msra.mxu0 %v182
    %364 = vmatpush.xpose.msra.mxu0 %v179
    %365 = vmatpush.xpose.msra.mxu0 %v176
    %366 = vmatpush.xpose.msra.mxu0 %v173
    %367 = vmatpush.xpose.msra.mxu0 %v170
    %368 = vmatpush.xpose.msra.mxu0 %v167
    %369 = vmatpush.xpose.msra.mxu0 %v164
    %370 = vmatpush.xpose.msra.mxu0 %v161
    %371 = vmatpush.xpose.msra.mxu0 %v158
    %372 = vmatpush.xpose.msra.mxu0 %v155
    %373 = vmatmul.f32.gmra.mxu0 %v355
    %v374 = vpop.f32.mrf.mxu0
    %v375 = vadd.f32 0.0, %v374
    %376 = vdwg.mxu0
    %v377 = vadd.f32 %v351, %v375
    %v378 = vmul.f32 %v377, %v144
    %v379 = vtanh.pop %v378
    %v380 = vmul.f32 %v379, 0.5
    %v381 = vadd.f32 %v380, 0.5
    %v382 = vmul.f32 %v381, %v340
    %384 = vrot.lane.b32.xlu0 %v379, 64
    %v385 = vpop.permute.xlu0 %384
    %v387 = vmul.f32 %v381, %v385
    %389 = vrot.lane.b32.xlu0 %v387, 32
    %v390 = vpop.permute.xlu0 %389
    %v392 = vadd.f32 %v382, %v390
    %v393 = vtanh.pop %v392
    %395 = vrot.lane.b32.xlu0 %v393, 64
    %v396 = vpop.permute.xlu0 %395
    %v398 = vmul.f32 %v381, %v396
    %v399 = vrot.slane %v134, 4
    %v401 = vrot.slane %v137, 3
    %v403 = vsel %vm148, %v399, %v401
    %405 = vrot.lane.b32.xlu0 %v398, 32
    %v406 = vpop.permute.xlu0 %405
    %v407 = vsel %vm150, %v406, 0
    %409 = vmatpush.xpose.msra.mxu0 %v200
    %410 = vmatpush.xpose.msra.mxu0 %v197
    %411 = vmatpush.xpose.msra.mxu0 %v194
    %412 = vmatpush.xpose.msra.mxu0 %v191
    %413 = vmatpush.xpose.msra.mxu0 %v188
    %414 = vmatpush.xpose.msra.mxu0 %v185
    %415 = vmatpush.xpose.msra.mxu0 %v182
    %416 = vmatpush.xpose.msra.mxu0 %v179
    %417 = vmatpush.xpose.msra.mxu0 %v176
    %418 = vmatpush.xpose.msra.mxu0 %v173
    %419 = vmatpush.xpose.msra.mxu0 %v170
    %420 = vmatpush.xpose.msra.mxu0 %v167
    %421 = vmatpush.xpose.msra.mxu0 %v164
    %422 = vmatpush.xpose.msra.mxu0 %v161
    %423 = vmatpush.xpose.msra.mxu0 %v158
    %424 = vmatpush.xpose.msra.mxu0 %v155
    %425 = vmatmul.f32.gmra.mxu0 %v407
    %v426 = vpop.f32.mrf.mxu0
    %v427 = vadd.f32 0.0, %v426
    %428 = vdwg.mxu0
    %v429 = vadd.f32 %v403, %v427
    %v430 = vmul.f32 %v429, %v144
    %v431 = vtanh.pop %v430
    %v432 = vmul.f32 %v431, 0.5
    %v433 = vadd.f32 %v432, 0.5
    %v434 = vmul.f32 %v433, %v392
    %436 = vrot.lane.b32.xlu0 %v431, 64
    %v437 = vpop.permute.xlu0 %436
    %v439 = vmul.f32 %v433, %v437
    %441 = vrot.lane.b32.xlu0 %v439, 32
    %v442 = vpop.permute.xlu0 %441
    %v444 = vadd.f32 %v434, %v442
    %v445 = vtanh.pop %v444
    %447 = vrot.lane.b32.xlu0 %v445, 64
    %v448 = vpop.permute.xlu0 %447
    %v450 = vmul.f32 %v433, %v448
    %v451 = vrot.slane %v134, 5
    %v453 = vrot.slane %v137, 4
    %v455 = vsel %vm148, %v451, %v453
    %457 = vrot.lane.b32.xlu0 %v450, 32
    %v458 = vpop.permute.xlu0 %457
    %v459 = vsel %vm150, %v458, 0
    %461 = vmatpush.xpose.msra.mxu0 %v200
    %462 = vmatpush.xpose.msra.mxu0 %v197
    %463 = vmatpush.xpose.msra.mxu0 %v194
    %464 = vmatpush.xpose.msra.mxu0 %v191
    %465 = vmatpush.xpose.msra.mxu0 %v188
    %466 = vmatpush.xpose.msra.mxu0 %v185
    %467 = vmatpush.xpose.msra.mxu0 %v182
    %468 = vmatpush.xpose.msra.mxu0 %v179
    %469 = vmatpush.xpose.msra.mxu0 %v176
    %470 = vmatpush.xpose.msra.mxu0 %v173
    %471 = vmatpush.xpose.msra.mxu0 %v170
    %472 = vmatpush.xpose.msra.mxu0 %v167
    %473 = vmatpush.xpose.msra.mxu0 %v164
    %474 = vmatpush.xpose.msra.mxu0 %v161
    %475 = vmatpush.xpose.msra.mxu0 %v158
    %476 = vmatpush.xpose.msra.mxu0 %v155
    %477 = vmatmul.f32.gmra.mxu0 %v459
    %v478 = vpop.f32.mrf.mxu0
    %v479 = vadd.f32 0.0, %v478
    %480 = vdwg.mxu0
    %v481 = vadd.f32 %v455, %v479
    %v482 = vmul.f32 %v481, %v144
    %v483 = vtanh.pop %v482
    %v484 = vmul.f32 %v483, 0.5
    %v485 = vadd.f32 %v484, 0.5
    %v486 = vmul.f32 %v485, %v444
    %488 = vrot.lane.b32.xlu0 %v483, 64
    %v489 = vpop.permute.xlu0 %488
    %v491 = vmul.f32 %v485, %v489
    %493 = vrot.lane.b32.xlu0 %v491, 32
    %v494 = vpop.permute.xlu0 %493
    %v496 = vadd.f32 %v486, %v494
    %v497 = vtanh.pop %v496
    %499 = vrot.lane.b32.xlu0 %v497, 64
    %v500 = vpop.permute.xlu0 %499
    %v502 = vmul.f32 %v485, %v500
    %v503 = vrot.slane %v134, 6
    %v505 = vrot.slane %v137, 5
    %v507 = vsel %vm148, %v503, %v505
    %509 = vrot.lane.b32.xlu0 %v502, 32
    %v510 = vpop.permute.xlu0 %509
    %v511 = vsel %vm150, %v510, 0
    %513 = vmatpush.xpose.msra.mxu0 %v200
    %514 = vmatpush.xpose.msra.mxu0 %v197
    %515 = vmatpush.xpose.msra.mxu0 %v194
    %516 = vmatpush.xpose.msra.mxu0 %v191
    %517 = vmatpush.xpose.msra.mxu0 %v188
    %518 = vmatpush.xpose.msra.mxu0 %v185
    %519 = vmatpush.xpose.msra.mxu0 %v182
    %520 = vmatpush.xpose.msra.mxu0 %v179
    %521 = vmatpush.xpose.msra.mxu0 %v176
    %522 = vmatpush.xpose.msra.mxu0 %v173
    %523 = vmatpush.xpose.msra.mxu0 %v170
    %524 = vmatpush.xpose.msra.mxu0 %v167
    %525 = vmatpush.xpose.msra.mxu0 %v164
    %526 = vmatpush.xpose.msra.mxu0 %v161
    %527 = vmatpush.xpose.msra.mxu0 %v158
    %528 = vmatpush.xpose.msra.mxu0 %v155
    %529 = vmatmul.f32.gmra.mxu0 %v511
    %v530 = vpop.f32.mrf.mxu0
    %v531 = vadd.f32 0.0, %v530
    %532 = vdwg.mxu0
    %v533 = vadd.f32 %v507, %v531
    %v534 = vmul.f32 %v533, %v144
    %v535 = vtanh.pop %v534
    %v536 = vmul.f32 %v535, 0.5
    %v537 = vadd.f32 %v536, 0.5
    %v538 = vmul.f32 %v537, %v496
    %540 = vrot.lane.b32.xlu0 %v535, 64
    %v541 = vpop.permute.xlu0 %540
    %v543 = vmul.f32 %v537, %v541
    %545 = vrot.lane.b32.xlu0 %v543, 32
    %v546 = vpop.permute.xlu0 %545
    %v548 = vadd.f32 %v538, %v546
    %v549 = vtanh.pop %v548
    %551 = vrot.lane.b32.xlu0 %v549, 64
    %v552 = vpop.permute.xlu0 %551
    %v554 = vmul.f32 %v537, %v552
    %v555 = vrot.slane %v134, 7
    %v557 = vrot.slane %v137, 6
    %v559 = vsel %vm148, %v555, %v557
    %561 = vrot.lane.b32.xlu0 %v554, 32
    %v562 = vpop.permute.xlu0 %561
    %v563 = vsel %vm150, %v562, 0
    %565 = vmatpush.xpose.msra.mxu0 %v200
    %566 = vmatpush.xpose.msra.mxu0 %v197
    %567 = vmatpush.xpose.msra.mxu0 %v194
    %568 = vmatpush.xpose.msra.mxu0 %v191
    %569 = vmatpush.xpose.msra.mxu0 %v188
    %570 = vmatpush.xpose.msra.mxu0 %v185
    %571 = vmatpush.xpose.msra.mxu0 %v182
    %572 = vmatpush.xpose.msra.mxu0 %v179
    %573 = vmatpush.xpose.msra.mxu0 %v176
    %574 = vmatpush.xpose.msra.mxu0 %v173
    %575 = vmatpush.xpose.msra.mxu0 %v170
    %576 = vmatpush.xpose.msra.mxu0 %v167
    %577 = vmatpush.xpose.msra.mxu0 %v164
    %578 = vmatpush.xpose.msra.mxu0 %v161
    %579 = vmatpush.xpose.msra.mxu0 %v158
    %580 = vmatpush.xpose.msra.mxu0 %v155
    %581 = vmatmul.f32.gmra.mxu0 %v563
    %v582 = vpop.f32.mrf.mxu0
    %v583 = vadd.f32 0.0, %v582
    %584 = vdwg.mxu0
    %v585 = vadd.f32 %v559, %v583
    %v586 = vmul.f32 %v585, %v144
    %v587 = vtanh.pop %v586
    %v588 = vmul.f32 %v587, 0.5
    %v589 = vadd.f32 %v588, 0.5
    %v590 = vmul.f32 %v589, %v548
    %592 = vrot.lane.b32.xlu0 %v587, 64
    %v593 = vpop.permute.xlu0 %592
    %v595 = vmul.f32 %v589, %v593
    %597 = vrot.lane.b32.xlu0 %v595, 32
    %v598 = vpop.permute.xlu0 %597
    %v600 = vadd.f32 %v590, %v598
    %v601 = vtanh.pop %v600
    %603 = vrot.lane.b32.xlu0 %v601, 64
    %v604 = vpop.permute.xlu0 %603
    %v606 = vmul.f32 %v589, %v604
    %608 = vrot.lane.b32.xlu0 %v606, 32
    %v609 = vpop.permute.xlu0 %608
    %vm611 = vcmask 254976
    %612 = vst.msk [vmem:[#allocation2] sm:$0x3] %vm611, %v609
    // Predicated region
    $region22: #{encoder_forward.1} parent=1 // pred_check
      _
    $region23: #{encoder_forward.1} parent=1 // pred_check_branch
      %614 = sbr.rel (0) target = $region25
    $region24: #{encoder_forward.1} parent=1 // pred_region
      %616 = vsyncadd [#allocation3], 0
      %s618 = sshll.u32 [#allocation2], 4
      %s619 = int_to_ptr.vmem [resolvable:$true] %s618
      %s620 = sshll.u32 %s5, 4
      %s621 = int_to_ptr.hbm [resolvable:$true] %s620
      %623 = dma.vmem_to_hbm [thread:$0]  %s619, 32, %s621, [#allocation3]
    $region25: #{encoder_forward.1} parent=1 // pred_fallthru
      _
    // Predicated region
    $region26: #{encoder_forward.1} parent=1 // pred_check
      _
    $region27: #{encoder_forward.1} parent=1 // pred_check_branch
      %625 = sbr.rel (0) target = $region29
    $region28: #{encoder_forward.1} parent=1 // pred_region
      %627 = dma.done [#allocation3], 32
    $region29: #{encoder_forward.1} parent=1 // pred_fallthru
      _
    %628 = vsyncpa [#allocation3], 1

</llo_original>
